<compile_context>
chip_gen: v7x
topology: tpu7x:2x2x1
jax: 0.10.0
libtpu: 0.0.40
codegen_flags: <defaults>
</compile_context>

<pallas_src>
import jax
import jax.numpy as jnp
import numpy as np
from jax.experimental import pallas as pl
from jax.experimental.pallas import tpu as pltpu

FEATURES = 22  # LSTM input_size fixed by the module


def lstm_fc_kernel(xg_ref, whh_ref, fcw_ref, fcb_ref, out_ref):
    """Single invocation: full T-step LSTM recurrence + final FC.

    xg_ref : (T, B, 4H) precomputed x_t @ W_ih^T + (b_ih + b_hh)
    whh_ref: (H, 4H)    W_hh^T
    fcw_ref: (1, H)     fc weight row
    fcb_ref: (1,)       fc bias scalar (SMEM)
    out_ref: (B, 1)
    """
    T, B, G = xg_ref.shape
    H = whh_ref.shape[0]

    # Hoist everything loop-invariant out of the recurrence.
    whh = whh_ref[...]                                     # (H, 4H)
    fcw = fcw_ref[...]                                     # (1, H)
    lane = jax.lax.broadcasted_iota(jnp.int32, (B, G), 1)  # lane ids 0..4H-1
    is_g_lane = (lane >= 2 * H) & (lane < 3 * H)           # tanh lanes (gate g)

    def step(t, carry):
        h, c = carry
        # Only the h-dependent matmul sits on the serial path.
        gates = xg_ref[t] + jnp.dot(h, whh, preferred_element_type=jnp.float32)
        # Full-vreg EUP activations, then lane-mask select (PyTorch order i,f,g,o).
        act = jnp.where(is_g_lane, jnp.tanh(gates), jax.nn.sigmoid(gates))
        i_g = act[:, 0 * H:1 * H]
        f_g = act[:, 1 * H:2 * H]
        g_g = act[:, 2 * H:3 * H]
        o_g = act[:, 3 * H:4 * H]
        c = f_g * c + i_g * g_g
        h = o_g * jnp.tanh(c)
        return (h, c)

    h0 = jnp.zeros((B, H), jnp.float32)
    c0 = jnp.zeros((B, H), jnp.float32)
    h, _ = jax.lax.fori_loop(0, T, step, (h0, c0), unroll=True)

    # fc(h_n[-1]) on the VPU/XLU: multiply + lane reduce (dropout p=0 -> identity).
    out_ref[...] = jnp.sum(h * fcw, axis=-1, keepdims=True) + fcb_ref[0]


@jax.jit
def lstm_model_forward(x, params):
    """x: [batch, seq, features] float32 -> [batch, 1] float32."""
    w_ih, w_hh, b_ih, b_hh, fc_w, fc_b = params
    B, T, F = x.shape
    H = w_hh.shape[1]

    # Hoist the input projection out of the recurrence: one batched matmul
    # over all T steps (fused by XLA into the same jitted program).
    x_tbf = jnp.transpose(x, (1, 0, 2))                           # (T, B, F)
    xg = jnp.einsum("tbf,gf->tbg", x_tbf, w_ih) + (b_ih + b_hh)   # (T, B, 4H)

    whh_t = jnp.transpose(w_hh)                                   # (H, 4H)
    fcw = fc_w.reshape(1, H)                                      # (1, H)
    fcb = fc_b.reshape(1)                                         # (1,) scalar

    # No grid: everything (a few KB) fits in VMEM; one kernel invocation.
    # TODO(synk): if batch grows, add a "parallel" batch grid axis so v7x's
    # second TensorCore takes half the batch; also batch to B>=8 sequences to
    # fill all 8 sublanes per vreg.
    out = pl.pallas_call(
        lstm_fc_kernel,
        out_shape=jax.ShapeDtypeStruct((B, 1), jnp.float32),
        in_specs=[
            pl.BlockSpec(memory_space=pltpu.MemorySpace.VMEM),   # xg
            pl.BlockSpec(memory_space=pltpu.MemorySpace.VMEM),   # W_hh^T
            pl.BlockSpec(memory_space=pltpu.MemorySpace.VMEM),   # fc weight
            pl.BlockSpec(memory_space=pltpu.MemorySpace.SMEM),   # fc bias scalar
        ],
        out_specs=pl.BlockSpec(memory_space=pltpu.MemorySpace.VMEM),
    )(xg, whh_t, fcw, fcb)
    return out


def init_params(key, hidden_size):
    """Deterministic init mimicking PyTorch's U(-1/sqrt(H), 1/sqrt(H))."""
    H = hidden_size
    k = 1.0 / np.sqrt(H)
    ks = jax.random.split(key, 6)
    w_ih = jax.random.uniform(ks[0], (4 * H, FEATURES), jnp.float32, -k, k)
    w_hh = jax.random.uniform(ks[1], (4 * H, H), jnp.float32, -k, k)
    b_ih = jax.random.uniform(ks[2], (4 * H,), jnp.float32, -k, k)
    b_hh = jax.random.uniform(ks[3], (4 * H,), jnp.float32, -k, k)
    fc_w = jax.random.uniform(ks[4], (1, H), jnp.float32, -k, k)
    fc_b = jax.random.uniform(ks[5], (1,), jnp.float32, -k, k)
    return (w_ih, w_hh, b_ih, b_hh, fc_w, fc_b)


def reference_forward(x, params):
    """Pure-JAX reference of the PyTorch forward (for sanity checking)."""
    w_ih, w_hh, b_ih, b_hh, fc_w, fc_b = params
    B, T, F = x.shape
    H = w_hh.shape[1]
    h = jnp.zeros((B, H), jnp.float32)
    c = jnp.zeros((B, H), jnp.float32)

    def step(carry, x_t):
        h, c = carry
        gates = x_t @ w_ih.T + h @ w_hh.T + b_ih + b_hh
        i = jax.nn.sigmoid(gates[:, 0 * H:1 * H])
        f = jax.nn.sigmoid(gates[:, 1 * H:2 * H])
        g = jnp.tanh(gates[:, 2 * H:3 * H])
        o = jax.nn.sigmoid(gates[:, 3 * H:4 * H])
        c = f * c + i * g
        h = o * jnp.tanh(c)
        return (h, c), None

    (h, c), _ = jax.lax.scan(step, (h, c), jnp.transpose(x, (1, 0, 2)))
    return h @ fc_w.T + fc_b


if __name__ == "__main__":
    hidden_size = 32
    batch, seq = 2, 8

    key = jax.random.PRNGKey(0)
    k_x, k_p = jax.random.split(key)
    x = jax.random.normal(k_x, (batch, seq, FEATURES), jnp.float32)
    params = init_params(k_p, hidden_size)

    pred = lstm_model_forward(x, params)
    pred = jax.block_until_ready(pred)

    ref = reference_forward(x, params)
    np.testing.assert_allclose(np.asarray(pred), np.asarray(ref),
                               rtol=1e-5, atol=1e-5)
    assert pred.shape == (batch, 1)
    print("KERNEL_OK")
</pallas_src>

<mosaic_0001>
module attributes {stable_mosaic.version = 11 : i64} {
  func.func @lstm_fc_kernel(%arg0: memref<8x2x128xf32, #tpu.memory_space<vmem>>, %arg1: memref<32x128xf32, #tpu.memory_space<vmem>>, %arg2: memref<1x32xf32, #tpu.memory_space<vmem>>, %arg3: memref<1xf32, #tpu.memory_space<smem>>, %arg4: memref<2x1xf32, #tpu.memory_space<vmem>>) attributes {dimension_semantics = [], scalar_prefetch = 0 : i64, scratch_operands = 0 : i64, tpu.core_type = #tpu.core_type<tc>} {
    %c0 = arith.constant 0 : index
    %c0_0 = arith.constant 0 : index
    %0 = vector.load %arg1[%c0, %c0_0] : memref<32x128xf32, #tpu.memory_space<vmem>>, vector<32x128xf32>
    %c0_1 = arith.constant 0 : index
    %c0_2 = arith.constant 0 : index
    %1 = vector.load %arg2[%c0_1, %c0_2] : memref<1x32xf32, #tpu.memory_space<vmem>>, vector<1x32xf32>
    %2 = tpu.iota {dimensions = array<i32: 1>} : vector<2x128xi32>
    %c64_i32 = arith.constant 64 : i32
    %3 = vector.broadcast %c64_i32 : i32 to vector<2x128xi32>
    %4 = arith.cmpi sge, %2, %3 : vector<2x128xi32>
    %c96_i32 = arith.constant 96 : i32
    %5 = vector.broadcast %c96_i32 : i32 to vector<2x128xi32>
    %6 = arith.cmpi slt, %2, %5 : vector<2x128xi32>
    %7 = arith.andi %4, %6 : vector<2x128xi1>
    %cst = arith.constant 0.000000e+00 : f32
    %8 = vector.broadcast %cst : f32 to vector<2x32xf32>
    %cst_3 = arith.constant 0.000000e+00 : f32
    %9 = vector.broadcast %cst_3 : f32 to vector<2x32xf32>
    %c0_i32 = arith.constant 0 : i32
    %10 = arith.index_cast %c0_i32 : i32 to index
    %c0_4 = arith.constant 0 : index
    %c0_5 = arith.constant 0 : index
    %11 = vector.load %arg0[%10, %c0_4, %c0_5] : memref<8x2x128xf32, #tpu.memory_space<vmem>>, vector<1x2x128xf32>
    %12 = vector.shape_cast %11 : vector<1x2x128xf32> to vector<2x128xf32>
    %cst_6 = arith.constant dense<0.000000e+00> : vector<2x128xf32>
    %13 = tpu.matmul %8, %0, %cst_6 {dimension_numbers = #tpu.dot_dimension_numbers<[1], [0], [0], [1], [0, 0, 1, 1], [], []>} : vector<2x32xf32>, vector<32x128xf32>, vector<2x128xf32> -> vector<2x128xf32>
    %14 = arith.addf %12, %13 : vector<2x128xf32>
    %15 = math.tanh %14 : vector<2x128xf32>
    %16 = arith.negf %14 : vector<2x128xf32>
    %17 = math.exp %16 : vector<2x128xf32>
    %cst_7 = arith.constant 1.000000e+00 : f32
    %18 = vector.broadcast %cst_7 : f32 to vector<2x128xf32>
    %19 = arith.addf %18, %17 : vector<2x128xf32>
    %20 = arith.divf %18, %19 : vector<2x128xf32>
    %21 = arith.select %7, %15, %20 : vector<2x128xi1>, vector<2x128xf32>
    %22 = vector.extract_strided_slice %21 {offsets = [0, 0], sizes = [2, 32], strides = [1, 1]} : vector<2x128xf32> to vector<2x32xf32>
    %23 = vector.extract_strided_slice %21 {offsets = [0, 32], sizes = [2, 32], strides = [1, 1]} : vector<2x128xf32> to vector<2x32xf32>
    %24 = vector.extract_strided_slice %21 {offsets = [0, 64], sizes = [2, 32], strides = [1, 1]} : vector<2x128xf32> to vector<2x32xf32>
    %25 = vector.extract_strided_slice %21 {offsets = [0, 96], sizes = [2, 32], strides = [1, 1]} : vector<2x128xf32> to vector<2x32xf32>
    %26 = arith.mulf %23, %9 : vector<2x32xf32>
    %27 = arith.mulf %22, %24 : vector<2x32xf32>
    %28 = arith.addf %26, %27 : vector<2x32xf32>
    %29 = math.tanh %28 : vector<2x32xf32>
    %30 = arith.mulf %25, %29 : vector<2x32xf32>
    %c1_i32 = arith.constant 1 : i32
    %31 = arith.index_cast %c1_i32 : i32 to index
    %c0_8 = arith.constant 0 : index
    %c0_9 = arith.constant 0 : index
    %32 = vector.load %arg0[%31, %c0_8, %c0_9] : memref<8x2x128xf32, #tpu.memory_space<vmem>>, vector<1x2x128xf32>
    %33 = vector.shape_cast %32 : vector<1x2x128xf32> to vector<2x128xf32>
    %cst_10 = arith.constant dense<0.000000e+00> : vector<2x128xf32>
    %34 = tpu.matmul %30, %0, %cst_10 {dimension_numbers = #tpu.dot_dimension_numbers<[1], [0], [0], [1], [0, 0, 1, 1], [], []>} : vector<2x32xf32>, vector<32x128xf32>, vector<2x128xf32> -> vector<2x128xf32>
    %35 = arith.addf %33, %34 : vector<2x128xf32>
    %36 = math.tanh %35 : vector<2x128xf32>
    %37 = arith.negf %35 : vector<2x128xf32>
    %38 = math.exp %37 : vector<2x128xf32>
    %cst_11 = arith.constant 1.000000e+00 : f32
    %39 = vector.broadcast %cst_11 : f32 to vector<2x128xf32>
    %40 = arith.addf %39, %38 : vector<2x128xf32>
    %41 = arith.divf %39, %40 : vector<2x128xf32>
    %42 = arith.select %7, %36, %41 : vector<2x128xi1>, vector<2x128xf32>
    %43 = vector.extract_strided_slice %42 {offsets = [0, 0], sizes = [2, 32], strides = [1, 1]} : vector<2x128xf32> to vector<2x32xf32>
    %44 = vector.extract_strided_slice %42 {offsets = [0, 32], sizes = [2, 32], strides = [1, 1]} : vector<2x128xf32> to vector<2x32xf32>
    %45 = vector.extract_strided_slice %42 {offsets = [0, 64], sizes = [2, 32], strides = [1, 1]} : vector<2x128xf32> to vector<2x32xf32>
    %46 = vector.extract_strided_slice %42 {offsets = [0, 96], sizes = [2, 32], strides = [1, 1]} : vector<2x128xf32> to vector<2x32xf32>
    %47 = arith.mulf %44, %28 : vector<2x32xf32>
    %48 = arith.mulf %43, %45 : vector<2x32xf32>
    %49 = arith.addf %47, %48 : vector<2x32xf32>
    %50 = math.tanh %49 : vector<2x32xf32>
    %51 = arith.mulf %46, %50 : vector<2x32xf32>
    %c2_i32 = arith.constant 2 : i32
    %52 = arith.index_cast %c2_i32 : i32 to index
    %c0_12 = arith.constant 0 : index
    %c0_13 = arith.constant 0 : index
    %53 = vector.load %arg0[%52, %c0_12, %c0_13] : memref<8x2x128xf32, #tpu.memory_space<vmem>>, vector<1x2x128xf32>
    %54 = vector.shape_cast %53 : vector<1x2x128xf32> to vector<2x128xf32>
    %cst_14 = arith.constant dense<0.000000e+00> : vector<2x128xf32>
    %55 = tpu.matmul %51, %0, %cst_14 {dimension_numbers = #tpu.dot_dimension_numbers<[1], [0], [0], [1], [0, 0, 1, 1], [], []>} : vector<2x32xf32>, vector<32x128xf32>, vector<2x128xf32> -> vector<2x128xf32>
    %56 = arith.addf %54, %55 : vector<2x128xf32>
    %57 = math.tanh %56 : vector<2x128xf32>
    %58 = arith.negf %56 : vector<2x128xf32>
    %59 = math.exp %58 : vector<2x128xf32>
    %cst_15 = arith.constant 1.000000e+00 : f32
    %60 = vector.broadcast %cst_15 : f32 to vector<2x128xf32>
    %61 = arith.addf %60, %59 : vector<2x128xf32>
    %62 = arith.divf %60, %61 : vector<2x128xf32>
    %63 = arith.select %7, %57, %62 : vector<2x128xi1>, vector<2x128xf32>
    %64 = vector.extract_strided_slice %63 {offsets = [0, 0], sizes = [2, 32], strides = [1, 1]} : vector<2x128xf32> to vector<2x32xf32>
    %65 = vector.extract_strided_slice %63 {offsets = [0, 32], sizes = [2, 32], strides = [1, 1]} : vector<2x128xf32> to vector<2x32xf32>
    %66 = vector.extract_strided_slice %63 {offsets = [0, 64], sizes = [2, 32], strides = [1, 1]} : vector<2x128xf32> to vector<2x32xf32>
    %67 = vector.extract_strided_slice %63 {offsets = [0, 96], sizes = [2, 32], strides = [1, 1]} : vector<2x128xf32> to vector<2x32xf32>
    %68 = arith.mulf %65, %49 : vector<2x32xf32>
    %69 = arith.mulf %64, %66 : vector<2x32xf32>
    %70 = arith.addf %68, %69 : vector<2x32xf32>
    %71 = math.tanh %70 : vector<2x32xf32>
    %72 = arith.mulf %67, %71 : vector<2x32xf32>
    %c3_i32 = arith.constant 3 : i32
    %73 = arith.index_cast %c3_i32 : i32 to index
    %c0_16 = arith.constant 0 : index
    %c0_17 = arith.constant 0 : index
    %74 = vector.load %arg0[%73, %c0_16, %c0_17] : memref<8x2x128xf32, #tpu.memory_space<vmem>>, vector<1x2x128xf32>
    %75 = vector.shape_cast %74 : vector<1x2x128xf32> to vector<2x128xf32>
    %cst_18 = arith.constant dense<0.000000e+00> : vector<2x128xf32>
    %76 = tpu.matmul %72, %0, %cst_18 {dimension_numbers = #tpu.dot_dimension_numbers<[1], [0], [0], [1], [0, 0, 1, 1], [], []>} : vector<2x32xf32>, vector<32x128xf32>, vector<2x128xf32> -> vector<2x128xf32>
    %77 = arith.addf %75, %76 : vector<2x128xf32>
    %78 = math.tanh %77 : vector<2x128xf32>
    %79 = arith.negf %77 : vector<2x128xf32>
    %80 = math.exp %79 : vector<2x128xf32>
    %cst_19 = arith.constant 1.000000e+00 : f32
    %81 = vector.broadcast %cst_19 : f32 to vector<2x128xf32>
    %82 = arith.addf %81, %80 : vector<2x128xf32>
    %83 = arith.divf %81, %82 : vector<2x128xf32>
    %84 = arith.select %7, %78, %83 : vector<2x128xi1>, vector<2x128xf32>
    %85 = vector.extract_strided_slice %84 {offsets = [0, 0], sizes = [2, 32], strides = [1, 1]} : vector<2x128xf32> to vector<2x32xf32>
    %86 = vector.extract_strided_slice %84 {offsets = [0, 32], sizes = [2, 32], strides = [1, 1]} : vector<2x128xf32> to vector<2x32xf32>
    %87 = vector.extract_strided_slice %84 {offsets = [0, 64], sizes = [2, 32], strides = [1, 1]} : vector<2x128xf32> to vector<2x32xf32>
    %88 = vector.extract_strided_slice %84 {offsets = [0, 96], sizes = [2, 32], strides = [1, 1]} : vector<2x128xf32> to vector<2x32xf32>
    %89 = arith.mulf %86, %70 : vector<2x32xf32>
    %90 = arith.mulf %85, %87 : vector<2x32xf32>
    %91 = arith.addf %89, %90 : vector<2x32xf32>
    %92 = math.tanh %91 : vector<2x32xf32>
    %93 = arith.mulf %88, %92 : vector<2x32xf32>
    %c4_i32 = arith.constant 4 : i32
    %94 = arith.index_cast %c4_i32 : i32 to index
    %c0_20 = arith.constant 0 : index
    %c0_21 = arith.constant 0 : index
    %95 = vector.load %arg0[%94, %c0_20, %c0_21] : memref<8x2x128xf32, #tpu.memory_space<vmem>>, vector<1x2x128xf32>
    %96 = vector.shape_cast %95 : vector<1x2x128xf32> to vector<2x128xf32>
    %cst_22 = arith.constant dense<0.000000e+00> : vector<2x128xf32>
    %97 = tpu.matmul %93, %0, %cst_22 {dimension_numbers = #tpu.dot_dimension_numbers<[1], [0], [0], [1], [0, 0, 1, 1], [], []>} : vector<2x32xf32>, vector<32x128xf32>, vector<2x128xf32> -> vector<2x128xf32>
    %98 = arith.addf %96, %97 : vector<2x128xf32>
    %99 = math.tanh %98 : vector<2x128xf32>
    %100 = arith.negf %98 : vector<2x128xf32>
    %101 = math.exp %100 : vector<2x128xf32>
    %cst_23 = arith.constant 1.000000e+00 : f32
    %102 = vector.broadcast %cst_23 : f32 to vector<2x128xf32>
    %103 = arith.addf %102, %101 : vector<2x128xf32>
    %104 = arith.divf %102, %103 : vector<2x128xf32>
    %105 = arith.select %7, %99, %104 : vector<2x128xi1>, vector<2x128xf32>
    %106 = vector.extract_strided_slice %105 {offsets = [0, 0], sizes = [2, 32], strides = [1, 1]} : vector<2x128xf32> to vector<2x32xf32>
    %107 = vector.extract_strided_slice %105 {offsets = [0, 32], sizes = [2, 32], strides = [1, 1]} : vector<2x128xf32> to vector<2x32xf32>
    %108 = vector.extract_strided_slice %105 {offsets = [0, 64], sizes = [2, 32], strides = [1, 1]} : vector<2x128xf32> to vector<2x32xf32>
    %109 = vector.extract_strided_slice %105 {offsets = [0, 96], sizes = [2, 32], strides = [1, 1]} : vector<2x128xf32> to vector<2x32xf32>
    %110 = arith.mulf %107, %91 : vector<2x32xf32>
    %111 = arith.mulf %106, %108 : vector<2x32xf32>
    %112 = arith.addf %110, %111 : vector<2x32xf32>
    %113 = math.tanh %112 : vector<2x32xf32>
    %114 = arith.mulf %109, %113 : vector<2x32xf32>
    %c5_i32 = arith.constant 5 : i32
    %115 = arith.index_cast %c5_i32 : i32 to index
    %c0_24 = arith.constant 0 : index
    %c0_25 = arith.constant 0 : index
    %116 = vector.load %arg0[%115, %c0_24, %c0_25] : memref<8x2x128xf32, #tpu.memory_space<vmem>>, vector<1x2x128xf32>
    %117 = vector.shape_cast %116 : vector<1x2x128xf32> to vector<2x128xf32>
    %cst_26 = arith.constant dense<0.000000e+00> : vector<2x128xf32>
    %118 = tpu.matmul %114, %0, %cst_26 {dimension_numbers = #tpu.dot_dimension_numbers<[1], [0], [0], [1], [0, 0, 1, 1], [], []>} : vector<2x32xf32>, vector<32x128xf32>, vector<2x128xf32> -> vector<2x128xf32>
    %119 = arith.addf %117, %118 : vector<2x128xf32>
    %120 = math.tanh %119 : vector<2x128xf32>
    %121 = arith.negf %119 : vector<2x128xf32>
    %122 = math.exp %121 : vector<2x128xf32>
    %cst_27 = arith.constant 1.000000e+00 : f32
    %123 = vector.broadcast %cst_27 : f32 to vector<2x128xf32>
    %124 = arith.addf %123, %122 : vector<2x128xf32>
    %125 = arith.divf %123, %124 : vector<2x128xf32>
    %126 = arith.select %7, %120, %125 : vector<2x128xi1>, vector<2x128xf32>
    %127 = vector.extract_strided_slice %126 {offsets = [0, 0], sizes = [2, 32], strides = [1, 1]} : vector<2x128xf32> to vector<2x32xf32>
    %128 = vector.extract_strided_slice %126 {offsets = [0, 32], sizes = [2, 32], strides = [1, 1]} : vector<2x128xf32> to vector<2x32xf32>
    %129 = vector.extract_strided_slice %126 {offsets = [0, 64], sizes = [2, 32], strides = [1, 1]} : vector<2x128xf32> to vector<2x32xf32>
    %130 = vector.extract_strided_slice %126 {offsets = [0, 96], sizes = [2, 32], strides = [1, 1]} : vector<2x128xf32> to vector<2x32xf32>
    %131 = arith.mulf %128, %112 : vector<2x32xf32>
    %132 = arith.mulf %127, %129 : vector<2x32xf32>
    %133 = arith.addf %131, %132 : vector<2x32xf32>
    %134 = math.tanh %133 : vector<2x32xf32>
    %135 = arith.mulf %130, %134 : vector<2x32xf32>
    %c6_i32 = arith.constant 6 : i32
    %136 = arith.index_cast %c6_i32 : i32 to index
    %c0_28 = arith.constant 0 : index
    %c0_29 = arith.constant 0 : index
    %137 = vector.load %arg0[%136, %c0_28, %c0_29] : memref<8x2x128xf32, #tpu.memory_space<vmem>>, vector<1x2x128xf32>
    %138 = vector.shape_cast %137 : vector<1x2x128xf32> to vector<2x128xf32>
    %cst_30 = arith.constant dense<0.000000e+00> : vector<2x128xf32>
    %139 = tpu.matmul %135, %0, %cst_30 {dimension_numbers = #tpu.dot_dimension_numbers<[1], [0], [0], [1], [0, 0, 1, 1], [], []>} : vector<2x32xf32>, vector<32x128xf32>, vector<2x128xf32> -> vector<2x128xf32>
    %140 = arith.addf %138, %139 : vector<2x128xf32>
    %141 = math.tanh %140 : vector<2x128xf32>
    %142 = arith.negf %140 : vector<2x128xf32>
    %143 = math.exp %142 : vector<2x128xf32>
    %cst_31 = arith.constant 1.000000e+00 : f32
    %144 = vector.broadcast %cst_31 : f32 to vector<2x128xf32>
    %145 = arith.addf %144, %143 : vector<2x128xf32>
    %146 = arith.divf %144, %145 : vector<2x128xf32>
    %147 = arith.select %7, %141, %146 : vector<2x128xi1>, vector<2x128xf32>
    %148 = vector.extract_strided_slice %147 {offsets = [0, 0], sizes = [2, 32], strides = [1, 1]} : vector<2x128xf32> to vector<2x32xf32>
    %149 = vector.extract_strided_slice %147 {offsets = [0, 32], sizes = [2, 32], strides = [1, 1]} : vector<2x128xf32> to vector<2x32xf32>
    %150 = vector.extract_strided_slice %147 {offsets = [0, 64], sizes = [2, 32], strides = [1, 1]} : vector<2x128xf32> to vector<2x32xf32>
    %151 = vector.extract_strided_slice %147 {offsets = [0, 96], sizes = [2, 32], strides = [1, 1]} : vector<2x128xf32> to vector<2x32xf32>
    %152 = arith.mulf %149, %133 : vector<2x32xf32>
    %153 = arith.mulf %148, %150 : vector<2x32xf32>
    %154 = arith.addf %152, %153 : vector<2x32xf32>
    %155 = math.tanh %154 : vector<2x32xf32>
    %156 = arith.mulf %151, %155 : vector<2x32xf32>
    %c7_i32 = arith.constant 7 : i32
    %157 = arith.index_cast %c7_i32 : i32 to index
    %c0_32 = arith.constant 0 : index
    %c0_33 = arith.constant 0 : index
    %158 = vector.load %arg0[%157, %c0_32, %c0_33] : memref<8x2x128xf32, #tpu.memory_space<vmem>>, vector<1x2x128xf32>
    %159 = vector.shape_cast %158 : vector<1x2x128xf32> to vector<2x128xf32>
    %cst_34 = arith.constant dense<0.000000e+00> : vector<2x128xf32>
    %160 = tpu.matmul %156, %0, %cst_34 {dimension_numbers = #tpu.dot_dimension_numbers<[1], [0], [0], [1], [0, 0, 1, 1], [], []>} : vector<2x32xf32>, vector<32x128xf32>, vector<2x128xf32> -> vector<2x128xf32>
    %161 = arith.addf %159, %160 : vector<2x128xf32>
    %162 = math.tanh %161 : vector<2x128xf32>
    %163 = arith.negf %161 : vector<2x128xf32>
    %164 = math.exp %163 : vector<2x128xf32>
    %cst_35 = arith.constant 1.000000e+00 : f32
    %165 = vector.broadcast %cst_35 : f32 to vector<2x128xf32>
    %166 = arith.addf %165, %164 : vector<2x128xf32>
    %167 = arith.divf %165, %166 : vector<2x128xf32>
    %168 = arith.select %7, %162, %167 : vector<2x128xi1>, vector<2x128xf32>
    %169 = vector.extract_strided_slice %168 {offsets = [0, 0], sizes = [2, 32], strides = [1, 1]} : vector<2x128xf32> to vector<2x32xf32>
    %170 = vector.extract_strided_slice %168 {offsets = [0, 32], sizes = [2, 32], strides = [1, 1]} : vector<2x128xf32> to vector<2x32xf32>
    %171 = vector.extract_strided_slice %168 {offsets = [0, 64], sizes = [2, 32], strides = [1, 1]} : vector<2x128xf32> to vector<2x32xf32>
    %172 = vector.extract_strided_slice %168 {offsets = [0, 96], sizes = [2, 32], strides = [1, 1]} : vector<2x128xf32> to vector<2x32xf32>
    %173 = arith.mulf %170, %154 : vector<2x32xf32>
    %174 = arith.mulf %169, %171 : vector<2x32xf32>
    %175 = arith.addf %173, %174 : vector<2x32xf32>
    %176 = math.tanh %175 : vector<2x32xf32>
    %177 = arith.mulf %172, %176 : vector<2x32xf32>
    %c8_i32 = arith.constant 8 : i32
    %178 = vector.broadcast %1 : vector<1x32xf32> to vector<2x32xf32>
    %179 = arith.mulf %177, %178 : vector<2x32xf32>
    %cst_36 = arith.constant dense<0.000000e+00> : vector<2xf32>
    %180 = vector.multi_reduction <add>, %179, %cst_36 [1] : vector<2x32xf32> to vector<2xf32>
    %181 = vector.shape_cast %180 : vector<2xf32> to vector<2x1xf32>
    %c0_37 = arith.constant 0 : index
    %182 = memref.load %arg3[%c0_37] : memref<1xf32, #tpu.memory_space<smem>>
    %183 = vector.broadcast %182 : f32 to vector<2x1xf32>
    %184 = arith.addf %181, %183 : vector<2x1xf32>
    %c0_38 = arith.constant 0 : index
    %c0_39 = arith.constant 0 : index
    %185 = vector.load %arg4[%c0_38, %c0_39] : memref<2x1xf32, #tpu.memory_space<vmem>>, vector<2x1xf32>
    tpu.vector_store %arg4[%c0_38, %c0_39], %184 {strides = array<i32>} : memref<2x1xf32, #tpu.memory_space<vmem>>, vector<2x1xf32>,
    return
  }
}

</mosaic_0001>

<llo_original>
// kernel: lstm_model_forward.1
$region0: #{lstm_model_forward.1}
  #allocation0 [shape = 'u32[]', space=smem, size = 0x4, offset = 0x4, fixed_abs, tag = 'smem constant byte address 0x4 - core index']
  #allocation1 [shape = 'u32[144,128]{1,0:T(1,128)}', space=vmem, size = 0x12000, scoped, tag = 'internal scratch']
  #allocation2 [shape = 'f32[1]{0:T(128)S(6)}', space=smem, size = 0x200, scoped, tag = 'scoped memory for lstm_model_forward.1']
  %s0 = inlined_call_operand.vmem [shape: f32[8,2,128], index: 0, kind: input, shape index: {}]
  %s1 = inlined_call_operand.vmem [shape: f32[32,128], index: 1, kind: input, shape index: {}]
  %s2 = inlined_call_operand.vmem [shape: f32[1,32], index: 2, kind: input, shape index: {}]
  %s3 = inlined_call_operand.<no memory space> [shape: f32[1], index: 3, kind: input, shape index: {}]
  %s4 = inlined_call_operand.vmem [shape: f32[2,1], index: 4, kind: output, shape index: {}]
  %s5 = sld [smem:[#allocation0]]
  $region26: #{lstm_model_forward.1} parent=0
    _
  %s7 = ssub.s32 1, %s5
  %s8 = scalar_select 0, %s7, %s5
  %9 = sst [smem:[#allocation2]] %s3
  // Predicated region
  $region2: #{lstm_model_forward.1} parent=0 // pred_check
    _
  $region3: #{lstm_model_forward.1} parent=0 // pred_check_branch
    %11 = sbr.rel (0) target = $region5
  $region4: #{lstm_model_forward.1} parent=0 // pred_region
    _
  $region5: #{lstm_model_forward.1} parent=0 // pred_fallthru
    _
  // Predicated region
  $region6: #{lstm_model_forward.1} parent=0 // pred_check
    _
  $region7: #{lstm_model_forward.1} parent=0 // pred_check_branch
    %13 = sbr.rel (0) target = $region9
  $region8: #{lstm_model_forward.1} parent=0 // pred_region
    _
  $region9: #{lstm_model_forward.1} parent=0 // pred_fallthru
    _
  // Predicated region
  $region10: #{lstm_model_forward.1} parent=0 // pred_check
    _
  $region11: #{lstm_model_forward.1} parent=0 // pred_check_branch
    %15 = sbr.rel (0) target = $region13
  $region12: #{lstm_model_forward.1} parent=0 // pred_region
    _
  $region13: #{lstm_model_forward.1} parent=0 // pred_fallthru
    _
  // Predicated region
  $region14: #{lstm_model_forward.1} parent=0 // pred_check
    _
  $region15: #{lstm_model_forward.1} parent=0 // pred_check_branch
    %17 = sbr.rel (0) target = $region17
  $region16: #{lstm_model_forward.1} parent=0 // pred_region
    _
  $region17: #{lstm_model_forward.1} parent=0 // pred_fallthru
    _
  %v18 = vld [vmem:[%s1] sm:$0xff]
  %v19 = vld [vmem:[%s1 + $0x8] sm:$0xff]
  %v20 = vld [vmem:[%s1 + $0x10] sm:$0xff]
  %v21 = vld [vmem:[%s1 + $0x18] sm:$0xff]
  %v22 = vld [vmem:[%s2] sm:$0x1]
  %v23 = vlaneseq
  %v24 = vand.u32 %v23, 127
  %vm25 = vcmp.ge.s32.totalorder %v24, 64
  %vm26 = vcmp.lt.s32.totalorder %v24, 96
  %vm27 = vmand %vm25, %vm26
  %v28 = vld [vmem:[%s0] sm:$0x3]
  %vm29 = vcmask 261120
  %v31 = vsel %vm29, 0.0, 0
  %33 = vmatprep.subr.mxu0 0.0
  %34 = vmatpush1.msra.mxu0 %v18
  %35 = vmatprep.subr.mxu0 0.0
  %36 = vmatpush1.msra.mxu0 %v19
  %37 = vmatprep.subr.mxu0 0.0
  %38 = vmatpush1.msra.mxu0 %v20
  %39 = vmatprep.subr.mxu0 0.0
  %40 = vmatpush1.msra.mxu0 %v21
  %41 = vmatprep.subr.mxu0 0.0
  %42 = vmatpush1.msra.mxu0 0.0
  %43 = vmatprep.subr.mxu0 0.0
  %44 = vmatpush1.msra.mxu0 0.0
  %45 = vmatprep.subr.mxu0 0.0
  %46 = vmatpush1.msra.mxu0 0.0
  %47 = vmatprep.subr.mxu0 0.0
  %48 = vmatpush1.msra.mxu0 0.0
  %49 = vmatprep.subr.mxu0 0.0
  %50 = vmatpush1.msra.mxu0 0.0
  %51 = vmatprep.subr.mxu0 0.0
  %52 = vmatpush1.msra.mxu0 0.0
  %53 = vmatprep.subr.mxu0 0.0
  %54 = vmatpush1.msra.mxu0 0.0
  %55 = vmatprep.subr.mxu0 0.0
  %56 = vmatpush1.msra.mxu0 0.0
  %57 = vmatprep.subr.mxu0 0.0
  %58 = vmatpush1.msra.mxu0 0.0
  %59 = vmatprep.subr.mxu0 0.0
  %60 = vmatpush1.msra.mxu0 0.0
  %61 = vmatprep.subr.mxu0 0.0
  %62 = vmatpush1.msra.mxu0 0.0
  %63 = vmatprep.subr.mxu0 0.0
  %64 = vmatpush1.msra.mxu0 0.0
  %65 = vmatprep.subr.mxu0 0.0
  %66 = vmatpush1.msra.mxu0 0.0
  %67 = vmatprep.subr.mxu0 0.0
  %68 = vmatpush1.msra.mxu0 0.0
  %69 = vmatprep.subr.mxu0 0.0
  %70 = vmatpush1.msra.mxu0 0.0
  %71 = vmatprep.subr.mxu0 0.0
  %72 = vmatpush1.msra.mxu0 0.0
  %73 = vmatprep.subr.mxu0 0.0
  %74 = vmatpush1.msra.mxu0 0.0
  %75 = vmatprep.subr.mxu0 0.0
  %76 = vmatpush1.msra.mxu0 0.0
  %77 = vmatprep.subr.mxu0 0.0
  %78 = vmatpush1.msra.mxu0 0.0
  %79 = vmatprep.subr.mxu0 0.0
  %80 = vmatpush1.msra.mxu0 0.0
  %81 = vmatprep.subr.mxu0 0.0
  %82 = vmatpush1.msra.mxu0 0.0
  %83 = vmatprep.subr.mxu0 0.0
  %84 = vmatpush1.msra.mxu0 0.0
  %85 = vmatprep.subr.mxu0 0.0
  %86 = vmatpush1.msra.mxu0 0.0
  %87 = vmatprep.subr.mxu0 0.0
  %88 = vmatpush1.msra.mxu0 0.0
  %89 = vmatprep.subr.mxu0 0.0
  %90 = vmatpush1.msra.mxu0 0.0
  %91 = vmatprep.subr.mxu0 0.0
  %92 = vmatpush1.msra.mxu0 0.0
  %93 = vmatprep.subr.mxu0 0.0
  %94 = vmatpush1.msra.mxu0 0.0
  %95 = vmatprep.subr.mxu0 0.0
  %96 = vmatpush1.msra.mxu0 0.0
  %97 = vmatprep.mubr.f32.mxu0 0.0
  %98 = vmatmul.mubr.f32.gmra.mrb[0].mxu0 %v31
  %v99 = vpop.f32.mrb[0].mxu0
  %v100 = vadd.f32 0.0, %v99
  %v101 = vpop.f32.mrb[0].mxu0
  %102 = vdwg.mxu0
  %v103 = vadd.f32 %v28, %v100
  %v104 = vtanh.pop %v103
  %v105 = vxor.u32 %v103, 2147483648
  %v106 = vmul.f32 %v105, 1.442695
  %v107 = vpow.pop %v106
  %v108 = vadd.f32 %v107, 1.0
  %v109 = vrcp.pop %v108
  %v110 = vmul.f32 1.0, %v109
  %v111 = vsel %vm27, %v104, %v110
  %v112 = vmul.f32 %v111, 0.0
  %114 = vrot.lane.b32.xlu0 %v111, 64
  %v115 = vpop.permute.xlu0 %114
  %v117 = vmul.f32 %v111, %v115
  %119 = vrot.lane.b32.xlu0 %v117, 32
  %v120 = vpop.permute.xlu0 %119
  %v122 = vadd.f32 %v112, %v120
  %v123 = vtanh.pop %v122
  %125 = vrot.lane.b32.xlu0 %v123, 64
  %v126 = vpop.permute.xlu0 %125
  %v128 = vmul.f32 %v111, %v126
  %s129 = scalar_lea.vmem %s0, 2
  %v130 = vld [vmem:[%s129] sm:$0x3]
  %132 = vrot.lane.b32.xlu0 %v128, 32
  %v133 = vpop.permute.xlu0 %132
  %v134 = vsel %vm29, %v133, 0
  %136 = vmatprep.subr.mxu0 0.0
  %137 = vmatpush1.msra.mxu0 %v18
  %138 = vmatprep.subr.mxu0 0.0
  %139 = vmatpush1.msra.mxu0 %v19
  %140 = vmatprep.subr.mxu0 0.0
  %141 = vmatpush1.msra.mxu0 %v20
  %142 = vmatprep.subr.mxu0 0.0
  %143 = vmatpush1.msra.mxu0 %v21
  %144 = vmatprep.subr.mxu0 0.0
  %145 = vmatpush1.msra.mxu0 0.0
  %146 = vmatprep.subr.mxu0 0.0
  %147 = vmatpush1.msra.mxu0 0.0
  %148 = vmatprep.subr.mxu0 0.0
  %149 = vmatpush1.msra.mxu0 0.0
  %150 = vmatprep.subr.mxu0 0.0
  %151 = vmatpush1.msra.mxu0 0.0
  %152 = vmatprep.subr.mxu0 0.0
  %153 = vmatpush1.msra.mxu0 0.0
  %154 = vmatprep.subr.mxu0 0.0
  %155 = vmatpush1.msra.mxu0 0.0
  %156 = vmatprep.subr.mxu0 0.0
  %157 = vmatpush1.msra.mxu0 0.0
  %158 = vmatprep.subr.mxu0 0.0
  %159 = vmatpush1.msra.mxu0 0.0
  %160 = vmatprep.subr.mxu0 0.0
  %161 = vmatpush1.msra.mxu0 0.0
  %162 = vmatprep.subr.mxu0 0.0
  %163 = vmatpush1.msra.mxu0 0.0
  %164 = vmatprep.subr.mxu0 0.0
  %165 = vmatpush1.msra.mxu0 0.0
  %166 = vmatprep.subr.mxu0 0.0
  %167 = vmatpush1.msra.mxu0 0.0
  %168 = vmatprep.subr.mxu0 0.0
  %169 = vmatpush1.msra.mxu0 0.0
  %170 = vmatprep.subr.mxu0 0.0
  %171 = vmatpush1.msra.mxu0 0.0
  %172 = vmatprep.subr.mxu0 0.0
  %173 = vmatpush1.msra.mxu0 0.0
  %174 = vmatprep.subr.mxu0 0.0
  %175 = vmatpush1.msra.mxu0 0.0
  %176 = vmatprep.subr.mxu0 0.0
  %177 = vmatpush1.msra.mxu0 0.0
  %178 = vmatprep.subr.mxu0 0.0
  %179 = vmatpush1.msra.mxu0 0.0
  %180 = vmatprep.subr.mxu0 0.0
  %181 = vmatpush1.msra.mxu0 0.0
  %182 = vmatprep.subr.mxu0 0.0
  %183 = vmatpush1.msra.mxu0 0.0
  %184 = vmatprep.subr.mxu0 0.0
  %185 = vmatpush1.msra.mxu0 0.0
  %186 = vmatprep.subr.mxu0 0.0
  %187 = vmatpush1.msra.mxu0 0.0
  %188 = vmatprep.subr.mxu0 0.0
  %189 = vmatpush1.msra.mxu0 0.0
  %190 = vmatprep.subr.mxu0 0.0
  %191 = vmatpush1.msra.mxu0 0.0
  %192 = vmatprep.subr.mxu0 0.0
  %193 = vmatpush1.msra.mxu0 0.0
  %194 = vmatprep.subr.mxu0 0.0
  %195 = vmatpush1.msra.mxu0 0.0
  %196 = vmatprep.subr.mxu0 0.0
  %197 = vmatpush1.msra.mxu0 0.0
  %198 = vmatprep.subr.mxu0 0.0
  %199 = vmatpush1.msra.mxu0 0.0
  %200 = vmatprep.mubr.f32.mxu0 0.0
  %201 = vmatmul.mubr.f32.gmra.mrb[0].mxu0 %v134
  %v202 = vpop.f32.mrb[0].mxu0
  %v203 = vadd.f32 0.0, %v202
  %v204 = vpop.f32.mrb[0].mxu0
  %205 = vdwg.mxu0
  %v206 = vadd.f32 %v130, %v203
  %v207 = vtanh.pop %v206
  %v208 = vxor.u32 %v206, 2147483648
  %v209 = vmul.f32 %v208, 1.442695
  %v210 = vpow.pop %v209
  %v211 = vadd.f32 %v210, 1.0
  %v212 = vrcp.pop %v211
  %v213 = vmul.f32 1.0, %v212
  %v214 = vsel %vm27, %v207, %v213
  %v215 = vmul.f32 %v214, %v122
  %217 = vrot.lane.b32.xlu0 %v214, 64
  %v218 = vpop.permute.xlu0 %217
  %v220 = vmul.f32 %v214, %v218
  %222 = vrot.lane.b32.xlu0 %v220, 32
  %v223 = vpop.permute.xlu0 %222
  %v225 = vadd.f32 %v215, %v223
  %v226 = vtanh.pop %v225
  %228 = vrot.lane.b32.xlu0 %v226, 64
  %v229 = vpop.permute.xlu0 %228
  %v231 = vmul.f32 %v214, %v229
  %s232 = scalar_lea.vmem %s0, 4
  %v233 = vld [vmem:[%s232] sm:$0x3]
  %235 = vrot.lane.b32.xlu0 %v231, 32
  %v236 = vpop.permute.xlu0 %235
  %v237 = vsel %vm29, %v236, 0
  %239 = vmatprep.subr.mxu0 0.0
  %240 = vmatpush1.msra.mxu0 %v18
  %241 = vmatprep.subr.mxu0 0.0
  %242 = vmatpush1.msra.mxu0 %v19
  %243 = vmatprep.subr.mxu0 0.0
  %244 = vmatpush1.msra.mxu0 %v20
  %245 = vmatprep.subr.mxu0 0.0
  %246 = vmatpush1.msra.mxu0 %v21
  %247 = vmatprep.subr.mxu0 0.0
  %248 = vmatpush1.msra.mxu0 0.0
  %249 = vmatprep.subr.mxu0 0.0
  %250 = vmatpush1.msra.mxu0 0.0
  %251 = vmatprep.subr.mxu0 0.0
  %252 = vmatpush1.msra.mxu0 0.0
  %253 = vmatprep.subr.mxu0 0.0
  %254 = vmatpush1.msra.mxu0 0.0
  %255 = vmatprep.subr.mxu0 0.0
  %256 = vmatpush1.msra.mxu0 0.0
  %257 = vmatprep.subr.mxu0 0.0
  %258 = vmatpush1.msra.mxu0 0.0
  %259 = vmatprep.subr.mxu0 0.0
  %260 = vmatpush1.msra.mxu0 0.0
  %261 = vmatprep.subr.mxu0 0.0
  %262 = vmatpush1.msra.mxu0 0.0
  %263 = vmatprep.subr.mxu0 0.0
  %264 = vmatpush1.msra.mxu0 0.0
  %265 = vmatprep.subr.mxu0 0.0
  %266 = vmatpush1.msra.mxu0 0.0
  %267 = vmatprep.subr.mxu0 0.0
  %268 = vmatpush1.msra.mxu0 0.0
  %269 = vmatprep.subr.mxu0 0.0
  %270 = vmatpush1.msra.mxu0 0.0
  %271 = vmatprep.subr.mxu0 0.0
  %272 = vmatpush1.msra.mxu0 0.0
  %273 = vmatprep.subr.mxu0 0.0
  %274 = vmatpush1.msra.mxu0 0.0
  %275 = vmatprep.subr.mxu0 0.0
  %276 = vmatpush1.msra.mxu0 0.0
  %277 = vmatprep.subr.mxu0 0.0
  %278 = vmatpush1.msra.mxu0 0.0
  %279 = vmatprep.subr.mxu0 0.0
  %280 = vmatpush1.msra.mxu0 0.0
  %281 = vmatprep.subr.mxu0 0.0
  %282 = vmatpush1.msra.mxu0 0.0
  %283 = vmatprep.subr.mxu0 0.0
  %284 = vmatpush1.msra.mxu0 0.0
  %285 = vmatprep.subr.mxu0 0.0
  %286 = vmatpush1.msra.mxu0 0.0
  %287 = vmatprep.subr.mxu0 0.0
  %288 = vmatpush1.msra.mxu0 0.0
  %289 = vmatprep.subr.mxu0 0.0
  %290 = vmatpush1.msra.mxu0 0.0
  %291 = vmatprep.subr.mxu0 0.0
  %292 = vmatpush1.msra.mxu0 0.0
  %293 = vmatprep.subr.mxu0 0.0
  %294 = vmatpush1.msra.mxu0 0.0
  %295 = vmatprep.subr.mxu0 0.0
  %296 = vmatpush1.msra.mxu0 0.0
  %297 = vmatprep.subr.mxu0 0.0
  %298 = vmatpush1.msra.mxu0 0.0
  %299 = vmatprep.subr.mxu0 0.0
  %300 = vmatpush1.msra.mxu0 0.0
  %301 = vmatprep.subr.mxu0 0.0
  %302 = vmatpush1.msra.mxu0 0.0
  %303 = vmatprep.mubr.f32.mxu0 0.0
  %304 = vmatmul.mubr.f32.gmra.mrb[0].mxu0 %v237
  %v305 = vpop.f32.mrb[0].mxu0
  %v306 = vadd.f32 0.0, %v305
  %v307 = vpop.f32.mrb[0].mxu0
  %308 = vdwg.mxu0
  %v309 = vadd.f32 %v233, %v306
  %v310 = vtanh.pop %v309
  %v311 = vxor.u32 %v309, 2147483648
  %v312 = vmul.f32 %v311, 1.442695
  %v313 = vpow.pop %v312
  %v314 = vadd.f32 %v313, 1.0
  %v315 = vrcp.pop %v314
  %v316 = vmul.f32 1.0, %v315
  %v317 = vsel %vm27, %v310, %v316
  %v318 = vmul.f32 %v317, %v225
  %320 = vrot.lane.b32.xlu0 %v317, 64
  %v321 = vpop.permute.xlu0 %320
  %v323 = vmul.f32 %v317, %v321
  %325 = vrot.lane.b32.xlu0 %v323, 32
  %v326 = vpop.permute.xlu0 %325
  %v328 = vadd.f32 %v318, %v326
  %v329 = vtanh.pop %v328
  %331 = vrot.lane.b32.xlu0 %v329, 64
  %v332 = vpop.permute.xlu0 %331
  %v334 = vmul.f32 %v317, %v332
  %s335 = scalar_lea.vmem %s0, 6
  %v336 = vld [vmem:[%s335] sm:$0x3]
  %338 = vrot.lane.b32.xlu0 %v334, 32
  %v339 = vpop.permute.xlu0 %338
  %v340 = vsel %vm29, %v339, 0
  %342 = vmatprep.subr.mxu0 0.0
  %343 = vmatpush1.msra.mxu0 %v18
  %344 = vmatprep.subr.mxu0 0.0
  %345 = vmatpush1.msra.mxu0 %v19
  %346 = vmatprep.subr.mxu0 0.0
  %347 = vmatpush1.msra.mxu0 %v20
  %348 = vmatprep.subr.mxu0 0.0
  %349 = vmatpush1.msra.mxu0 %v21
  %350 = vmatprep.subr.mxu0 0.0
  %351 = vmatpush1.msra.mxu0 0.0
  %352 = vmatprep.subr.mxu0 0.0
  %353 = vmatpush1.msra.mxu0 0.0
  %354 = vmatprep.subr.mxu0 0.0
  %355 = vmatpush1.msra.mxu0 0.0
  %356 = vmatprep.subr.mxu0 0.0
  %357 = vmatpush1.msra.mxu0 0.0
  %358 = vmatprep.subr.mxu0 0.0
  %359 = vmatpush1.msra.mxu0 0.0
  %360 = vmatprep.subr.mxu0 0.0
  %361 = vmatpush1.msra.mxu0 0.0
  %362 = vmatprep.subr.mxu0 0.0
  %363 = vmatpush1.msra.mxu0 0.0
  %364 = vmatprep.subr.mxu0 0.0
  %365 = vmatpush1.msra.mxu0 0.0
  %366 = vmatprep.subr.mxu0 0.0
  %367 = vmatpush1.msra.mxu0 0.0
  %368 = vmatprep.subr.mxu0 0.0
  %369 = vmatpush1.msra.mxu0 0.0
  %370 = vmatprep.subr.mxu0 0.0
  %371 = vmatpush1.msra.mxu0 0.0
  %372 = vmatprep.subr.mxu0 0.0
  %373 = vmatpush1.msra.mxu0 0.0
  %374 = vmatprep.subr.mxu0 0.0
  %375 = vmatpush1.msra.mxu0 0.0
  %376 = vmatprep.subr.mxu0 0.0
  %377 = vmatpush1.msra.mxu0 0.0
  %378 = vmatprep.subr.mxu0 0.0
  %379 = vmatpush1.msra.mxu0 0.0
  %380 = vmatprep.subr.mxu0 0.0
  %381 = vmatpush1.msra.mxu0 0.0
  %382 = vmatprep.subr.mxu0 0.0
  %383 = vmatpush1.msra.mxu0 0.0
  %384 = vmatprep.subr.mxu0 0.0
  %385 = vmatpush1.msra.mxu0 0.0
  %386 = vmatprep.subr.mxu0 0.0
  %387 = vmatpush1.msra.mxu0 0.0
  %388 = vmatprep.subr.mxu0 0.0
  %389 = vmatpush1.msra.mxu0 0.0
  %390 = vmatprep.subr.mxu0 0.0
  %391 = vmatpush1.msra.mxu0 0.0
  %392 = vmatprep.subr.mxu0 0.0
  %393 = vmatpush1.msra.mxu0 0.0
  %394 = vmatprep.subr.mxu0 0.0
  %395 = vmatpush1.msra.mxu0 0.0
  %396 = vmatprep.subr.mxu0 0.0
  %397 = vmatpush1.msra.mxu0 0.0
  %398 = vmatprep.subr.mxu0 0.0
  %399 = vmatpush1.msra.mxu0 0.0
  %400 = vmatprep.subr.mxu0 0.0
  %401 = vmatpush1.msra.mxu0 0.0
  %402 = vmatprep.subr.mxu0 0.0
  %403 = vmatpush1.msra.mxu0 0.0
  %404 = vmatprep.subr.mxu0 0.0
  %405 = vmatpush1.msra.mxu0 0.0
  %406 = vmatprep.mubr.f32.mxu0 0.0
  %407 = vmatmul.mubr.f32.gmra.mrb[0].mxu0 %v340
  %v408 = vpop.f32.mrb[0].mxu0
  %v409 = vadd.f32 0.0, %v408
  %v410 = vpop.f32.mrb[0].mxu0
  %411 = vdwg.mxu0
  %v412 = vadd.f32 %v336, %v409
  %v413 = vtanh.pop %v412
  %v414 = vxor.u32 %v412, 2147483648
  %v415 = vmul.f32 %v414, 1.442695
  %v416 = vpow.pop %v415
  %v417 = vadd.f32 %v416, 1.0
  %v418 = vrcp.pop %v417
  %v419 = vmul.f32 1.0, %v418
  %v420 = vsel %vm27, %v413, %v419
  %v421 = vmul.f32 %v420, %v328
  %423 = vrot.lane.b32.xlu0 %v420, 64
  %v424 = vpop.permute.xlu0 %423
  %v426 = vmul.f32 %v420, %v424
  %428 = vrot.lane.b32.xlu0 %v426, 32
  %v429 = vpop.permute.xlu0 %428
  %v431 = vadd.f32 %v421, %v429
  %v432 = vtanh.pop %v431
  %434 = vrot.lane.b32.xlu0 %v432, 64
  %v435 = vpop.permute.xlu0 %434
  %v437 = vmul.f32 %v420, %v435
  %s438 = scalar_lea.vmem %s0, 8
  %v439 = vld [vmem:[%s438] sm:$0x3]
  %441 = vrot.lane.b32.xlu0 %v437, 32
  %v442 = vpop.permute.xlu0 %441
  %v443 = vsel %vm29, %v442, 0
  %445 = vmatprep.subr.mxu0 0.0
  %446 = vmatpush1.msra.mxu0 %v18
  %447 = vmatprep.subr.mxu0 0.0
  %448 = vmatpush1.msra.mxu0 %v19
  %449 = vmatprep.subr.mxu0 0.0
  %450 = vmatpush1.msra.mxu0 %v20
  %451 = vmatprep.subr.mxu0 0.0
  %452 = vmatpush1.msra.mxu0 %v21
  %453 = vmatprep.subr.mxu0 0.0
  %454 = vmatpush1.msra.mxu0 0.0
  %455 = vmatprep.subr.mxu0 0.0
  %456 = vmatpush1.msra.mxu0 0.0
  %457 = vmatprep.subr.mxu0 0.0
  %458 = vmatpush1.msra.mxu0 0.0
  %459 = vmatprep.subr.mxu0 0.0
  %460 = vmatpush1.msra.mxu0 0.0
  %461 = vmatprep.subr.mxu0 0.0
  %462 = vmatpush1.msra.mxu0 0.0
  %463 = vmatprep.subr.mxu0 0.0
  %464 = vmatpush1.msra.mxu0 0.0
  %465 = vmatprep.subr.mxu0 0.0
  %466 = vmatpush1.msra.mxu0 0.0
  %467 = vmatprep.subr.mxu0 0.0
  %468 = vmatpush1.msra.mxu0 0.0
  %469 = vmatprep.subr.mxu0 0.0
  %470 = vmatpush1.msra.mxu0 0.0
  %471 = vmatprep.subr.mxu0 0.0
  %472 = vmatpush1.msra.mxu0 0.0
  %473 = vmatprep.subr.mxu0 0.0
  %474 = vmatpush1.msra.mxu0 0.0
  %475 = vmatprep.subr.mxu0 0.0
  %476 = vmatpush1.msra.mxu0 0.0
  %477 = vmatprep.subr.mxu0 0.0
  %478 = vmatpush1.msra.mxu0 0.0
  %479 = vmatprep.subr.mxu0 0.0
  %480 = vmatpush1.msra.mxu0 0.0
  %481 = vmatprep.subr.mxu0 0.0
  %482 = vmatpush1.msra.mxu0 0.0
  %483 = vmatprep.subr.mxu0 0.0
  %484 = vmatpush1.msra.mxu0 0.0
  %485 = vmatprep.subr.mxu0 0.0
  %486 = vmatpush1.msra.mxu0 0.0
  %487 = vmatprep.subr.mxu0 0.0
  %488 = vmatpush1.msra.mxu0 0.0
  %489 = vmatprep.subr.mxu0 0.0
  %490 = vmatpush1.msra.mxu0 0.0
  %491 = vmatprep.subr.mxu0 0.0
  %492 = vmatpush1.msra.mxu0 0.0
  %493 = vmatprep.subr.mxu0 0.0
  %494 = vmatpush1.msra.mxu0 0.0
  %495 = vmatprep.subr.mxu0 0.0
  %496 = vmatpush1.msra.mxu0 0.0
  %497 = vmatprep.subr.mxu0 0.0
  %498 = vmatpush1.msra.mxu0 0.0
  %499 = vmatprep.subr.mxu0 0.0
  %500 = vmatpush1.msra.mxu0 0.0
  %501 = vmatprep.subr.mxu0 0.0
  %502 = vmatpush1.msra.mxu0 0.0
  %503 = vmatprep.subr.mxu0 0.0
  %504 = vmatpush1.msra.mxu0 0.0
  %505 = vmatprep.subr.mxu0 0.0
  %506 = vmatpush1.msra.mxu0 0.0
  %507 = vmatprep.subr.mxu0 0.0
  %508 = vmatpush1.msra.mxu0 0.0
  %509 = vmatprep.mubr.f32.mxu0 0.0
  %510 = vmatmul.mubr.f32.gmra.mrb[0].mxu0 %v443
  %v511 = vpop.f32.mrb[0].mxu0
  %v512 = vadd.f32 0.0, %v511
  %v513 = vpop.f32.mrb[0].mxu0
  %514 = vdwg.mxu0
  %v515 = vadd.f32 %v439, %v512
  %v516 = vtanh.pop %v515
  %v517 = vxor.u32 %v515, 2147483648
  %v518 = vmul.f32 %v517, 1.442695
  %v519 = vpow.pop %v518
  %v520 = vadd.f32 %v519, 1.0
  %v521 = vrcp.pop %v520
  %v522 = vmul.f32 1.0, %v521
  %v523 = vsel %vm27, %v516, %v522
  %v524 = vmul.f32 %v523, %v431
  %526 = vrot.lane.b32.xlu0 %v523, 64
  %v527 = vpop.permute.xlu0 %526
  %v529 = vmul.f32 %v523, %v527
  %531 = vrot.lane.b32.xlu0 %v529, 32
  %v532 = vpop.permute.xlu0 %531
  %v534 = vadd.f32 %v524, %v532
  %v535 = vtanh.pop %v534
  %537 = vrot.lane.b32.xlu0 %v535, 64
  %v538 = vpop.permute.xlu0 %537
  %v540 = vmul.f32 %v523, %v538
  %s541 = scalar_lea.vmem %s0, 10
  %v542 = vld [vmem:[%s541] sm:$0x3]
  %544 = vrot.lane.b32.xlu0 %v540, 32
  %v545 = vpop.permute.xlu0 %544
  %v546 = vsel %vm29, %v545, 0
  %548 = vmatprep.subr.mxu0 0.0
  %549 = vmatpush1.msra.mxu0 %v18
  %550 = vmatprep.subr.mxu0 0.0
  %551 = vmatpush1.msra.mxu0 %v19
  %552 = vmatprep.subr.mxu0 0.0
  %553 = vmatpush1.msra.mxu0 %v20
  %554 = vmatprep.subr.mxu0 0.0
  %555 = vmatpush1.msra.mxu0 %v21
  %556 = vmatprep.subr.mxu0 0.0
  %557 = vmatpush1.msra.mxu0 0.0
  %558 = vmatprep.subr.mxu0 0.0
  %559 = vmatpush1.msra.mxu0 0.0
  %560 = vmatprep.subr.mxu0 0.0
  %561 = vmatpush1.msra.mxu0 0.0
  %562 = vmatprep.subr.mxu0 0.0
  %563 = vmatpush1.msra.mxu0 0.0
  %564 = vmatprep.subr.mxu0 0.0
  %565 = vmatpush1.msra.mxu0 0.0
  %566 = vmatprep.subr.mxu0 0.0
  %567 = vmatpush1.msra.mxu0 0.0
  %568 = vmatprep.subr.mxu0 0.0
  %569 = vmatpush1.msra.mxu0 0.0
  %570 = vmatprep.subr.mxu0 0.0
  %571 = vmatpush1.msra.mxu0 0.0
  %572 = vmatprep.subr.mxu0 0.0
  %573 = vmatpush1.msra.mxu0 0.0
  %574 = vmatprep.subr.mxu0 0.0
  %575 = vmatpush1.msra.mxu0 0.0
  %576 = vmatprep.subr.mxu0 0.0
  %577 = vmatpush1.msra.mxu0 0.0
  %578 = vmatprep.subr.mxu0 0.0
  %579 = vmatpush1.msra.mxu0 0.0
  %580 = vmatprep.subr.mxu0 0.0
  %581 = vmatpush1.msra.mxu0 0.0
  %582 = vmatprep.subr.mxu0 0.0
  %583 = vmatpush1.msra.mxu0 0.0
  %584 = vmatprep.subr.mxu0 0.0
  %585 = vmatpush1.msra.mxu0 0.0
  %586 = vmatprep.subr.mxu0 0.0
  %587 = vmatpush1.msra.mxu0 0.0
  %588 = vmatprep.subr.mxu0 0.0
  %589 = vmatpush1.msra.mxu0 0.0
  %590 = vmatprep.subr.mxu0 0.0
  %591 = vmatpush1.msra.mxu0 0.0
  %592 = vmatprep.subr.mxu0 0.0
  %593 = vmatpush1.msra.mxu0 0.0
  %594 = vmatprep.subr.mxu0 0.0
  %595 = vmatpush1.msra.mxu0 0.0
  %596 = vmatprep.subr.mxu0 0.0
  %597 = vmatpush1.msra.mxu0 0.0
  %598 = vmatprep.subr.mxu0 0.0
  %599 = vmatpush1.msra.mxu0 0.0
  %600 = vmatprep.subr.mxu0 0.0
  %601 = vmatpush1.msra.mxu0 0.0
  %602 = vmatprep.subr.mxu0 0.0
  %603 = vmatpush1.msra.mxu0 0.0
  %604 = vmatprep.subr.mxu0 0.0
  %605 = vmatpush1.msra.mxu0 0.0
  %606 = vmatprep.subr.mxu0 0.0
  %607 = vmatpush1.msra.mxu0 0.0
  %608 = vmatprep.subr.mxu0 0.0
  %609 = vmatpush1.msra.mxu0 0.0
  %610 = vmatprep.subr.mxu0 0.0
  %611 = vmatpush1.msra.mxu0 0.0
  %612 = vmatprep.mubr.f32.mxu0 0.0
  %613 = vmatmul.mubr.f32.gmra.mrb[0].mxu0 %v546
  %v614 = vpop.f32.mrb[0].mxu0
  %v615 = vadd.f32 0.0, %v614
  %v616 = vpop.f32.mrb[0].mxu0
  %617 = vdwg.mxu0
  %v618 = vadd.f32 %v542, %v615
  %v619 = vtanh.pop %v618
  %v620 = vxor.u32 %v618, 2147483648
  %v621 = vmul.f32 %v620, 1.442695
  %v622 = vpow.pop %v621
  %v623 = vadd.f32 %v622, 1.0
  %v624 = vrcp.pop %v623
  %v625 = vmul.f32 1.0, %v624
  %v626 = vsel %vm27, %v619, %v625
  %v627 = vmul.f32 %v626, %v534
  %629 = vrot.lane.b32.xlu0 %v626, 64
  %v630 = vpop.permute.xlu0 %629
  %v632 = vmul.f32 %v626, %v630
  %634 = vrot.lane.b32.xlu0 %v632, 32
  %v635 = vpop.permute.xlu0 %634
  %v637 = vadd.f32 %v627, %v635
  %v638 = vtanh.pop %v637
  %640 = vrot.lane.b32.xlu0 %v638, 64
  %v641 = vpop.permute.xlu0 %640
  %v643 = vmul.f32 %v626, %v641
  %s644 = scalar_lea.vmem %s0, 12
  %v645 = vld [vmem:[%s644] sm:$0x3]
  %647 = vrot.lane.b32.xlu0 %v643, 32
  %v648 = vpop.permute.xlu0 %647
  %v649 = vsel %vm29, %v648, 0
  %651 = vmatprep.subr.mxu0 0.0
  %652 = vmatpush1.msra.mxu0 %v18
  %653 = vmatprep.subr.mxu0 0.0
  %654 = vmatpush1.msra.mxu0 %v19
  %655 = vmatprep.subr.mxu0 0.0
  %656 = vmatpush1.msra.mxu0 %v20
  %657 = vmatprep.subr.mxu0 0.0
  %658 = vmatpush1.msra.mxu0 %v21
  %659 = vmatprep.subr.mxu0 0.0
  %660 = vmatpush1.msra.mxu0 0.0
  %661 = vmatprep.subr.mxu0 0.0
  %662 = vmatpush1.msra.mxu0 0.0
  %663 = vmatprep.subr.mxu0 0.0
  %664 = vmatpush1.msra.mxu0 0.0
  %665 = vmatprep.subr.mxu0 0.0
  %666 = vmatpush1.msra.mxu0 0.0
  %667 = vmatprep.subr.mxu0 0.0
  %668 = vmatpush1.msra.mxu0 0.0
  %669 = vmatprep.subr.mxu0 0.0
  %670 = vmatpush1.msra.mxu0 0.0
  %671 = vmatprep.subr.mxu0 0.0
  %672 = vmatpush1.msra.mxu0 0.0
  %673 = vmatprep.subr.mxu0 0.0
  %674 = vmatpush1.msra.mxu0 0.0
  %675 = vmatprep.subr.mxu0 0.0
  %676 = vmatpush1.msra.mxu0 0.0
  %677 = vmatprep.subr.mxu0 0.0
  %678 = vmatpush1.msra.mxu0 0.0
  %679 = vmatprep.subr.mxu0 0.0
  %680 = vmatpush1.msra.mxu0 0.0
  %681 = vmatprep.subr.mxu0 0.0
  %682 = vmatpush1.msra.mxu0 0.0
  %683 = vmatprep.subr.mxu0 0.0
  %684 = vmatpush1.msra.mxu0 0.0
  %685 = vmatprep.subr.mxu0 0.0
  %686 = vmatpush1.msra.mxu0 0.0
  %687 = vmatprep.subr.mxu0 0.0
  %688 = vmatpush1.msra.mxu0 0.0
  %689 = vmatprep.subr.mxu0 0.0
  %690 = vmatpush1.msra.mxu0 0.0
  %691 = vmatprep.subr.mxu0 0.0
  %692 = vmatpush1.msra.mxu0 0.0
  %693 = vmatprep.subr.mxu0 0.0
  %694 = vmatpush1.msra.mxu0 0.0
  %695 = vmatprep.subr.mxu0 0.0
  %696 = vmatpush1.msra.mxu0 0.0
  %697 = vmatprep.subr.mxu0 0.0
  %698 = vmatpush1.msra.mxu0 0.0
  %699 = vmatprep.subr.mxu0 0.0
  %700 = vmatpush1.msra.mxu0 0.0
  %701 = vmatprep.subr.mxu0 0.0
  %702 = vmatpush1.msra.mxu0 0.0
  %703 = vmatprep.subr.mxu0 0.0
  %704 = vmatpush1.msra.mxu0 0.0
  %705 = vmatprep.subr.mxu0 0.0
  %706 = vmatpush1.msra.mxu0 0.0
  %707 = vmatprep.subr.mxu0 0.0
  %708 = vmatpush1.msra.mxu0 0.0
  %709 = vmatprep.subr.mxu0 0.0
  %710 = vmatpush1.msra.mxu0 0.0
  %711 = vmatprep.subr.mxu0 0.0
  %712 = vmatpush1.msra.mxu0 0.0
  %713 = vmatprep.subr.mxu0 0.0
  %714 = vmatpush1.msra.mxu0 0.0
  %715 = vmatprep.mubr.f32.mxu0 0.0
  %716 = vmatmul.mubr.f32.gmra.mrb[0].mxu0 %v649
  %v717 = vpop.f32.mrb[0].mxu0
  %v718 = vadd.f32 0.0, %v717
  %v719 = vpop.f32.mrb[0].mxu0
  %720 = vdwg.mxu0
  %v721 = vadd.f32 %v645, %v718
  %v722 = vtanh.pop %v721
  %v723 = vxor.u32 %v721, 2147483648
  %v724 = vmul.f32 %v723, 1.442695
  %v725 = vpow.pop %v724
  %v726 = vadd.f32 %v725, 1.0
  %v727 = vrcp.pop %v726
  %v728 = vmul.f32 1.0, %v727
  %v729 = vsel %vm27, %v722, %v728
  %v730 = vmul.f32 %v729, %v637
  %732 = vrot.lane.b32.xlu0 %v729, 64
  %v733 = vpop.permute.xlu0 %732
  %v735 = vmul.f32 %v729, %v733
  %737 = vrot.lane.b32.xlu0 %v735, 32
  %v738 = vpop.permute.xlu0 %737
  %v740 = vadd.f32 %v730, %v738
  %v741 = vtanh.pop %v740
  %743 = vrot.lane.b32.xlu0 %v741, 64
  %v744 = vpop.permute.xlu0 %743
  %v746 = vmul.f32 %v729, %v744
  %s747 = scalar_lea.vmem %s0, 14
  %v748 = vld [vmem:[%s747] sm:$0x3]
  %750 = vrot.lane.b32.xlu0 %v746, 32
  %v751 = vpop.permute.xlu0 %750
  %v752 = vsel %vm29, %v751, 0
  %754 = vmatprep.subr.mxu0 0.0
  %755 = vmatpush1.msra.mxu0 %v18
  %756 = vmatprep.subr.mxu0 0.0
  %757 = vmatpush1.msra.mxu0 %v19
  %758 = vmatprep.subr.mxu0 0.0
  %759 = vmatpush1.msra.mxu0 %v20
  %760 = vmatprep.subr.mxu0 0.0
  %761 = vmatpush1.msra.mxu0 %v21
  %762 = vmatprep.subr.mxu0 0.0
  %763 = vmatpush1.msra.mxu0 0.0
  %764 = vmatprep.subr.mxu0 0.0
  %765 = vmatpush1.msra.mxu0 0.0
  %766 = vmatprep.subr.mxu0 0.0
  %767 = vmatpush1.msra.mxu0 0.0
  %768 = vmatprep.subr.mxu0 0.0
  %769 = vmatpush1.msra.mxu0 0.0
  %770 = vmatprep.subr.mxu0 0.0
  %771 = vmatpush1.msra.mxu0 0.0
  %772 = vmatprep.subr.mxu0 0.0
  %773 = vmatpush1.msra.mxu0 0.0
  %774 = vmatprep.subr.mxu0 0.0
  %775 = vmatpush1.msra.mxu0 0.0
  %776 = vmatprep.subr.mxu0 0.0
  %777 = vmatpush1.msra.mxu0 0.0
  %778 = vmatprep.subr.mxu0 0.0
  %779 = vmatpush1.msra.mxu0 0.0
  %780 = vmatprep.subr.mxu0 0.0
  %781 = vmatpush1.msra.mxu0 0.0
  %782 = vmatprep.subr.mxu0 0.0
  %783 = vmatpush1.msra.mxu0 0.0
  %784 = vmatprep.subr.mxu0 0.0
  %785 = vmatpush1.msra.mxu0 0.0
  %786 = vmatprep.subr.mxu0 0.0
  %787 = vmatpush1.msra.mxu0 0.0
  %788 = vmatprep.subr.mxu0 0.0
  %789 = vmatpush1.msra.mxu0 0.0
  %790 = vmatprep.subr.mxu0 0.0
  %791 = vmatpush1.msra.mxu0 0.0
  %792 = vmatprep.subr.mxu0 0.0
  %793 = vmatpush1.msra.mxu0 0.0
  %794 = vmatprep.subr.mxu0 0.0
  %795 = vmatpush1.msra.mxu0 0.0
  %796 = vmatprep.subr.mxu0 0.0
  %797 = vmatpush1.msra.mxu0 0.0
  %798 = vmatprep.subr.mxu0 0.0
  %799 = vmatpush1.msra.mxu0 0.0
  %800 = vmatprep.subr.mxu0 0.0
  %801 = vmatpush1.msra.mxu0 0.0
  %802 = vmatprep.subr.mxu0 0.0
  %803 = vmatpush1.msra.mxu0 0.0
  %804 = vmatprep.subr.mxu0 0.0
  %805 = vmatpush1.msra.mxu0 0.0
  %806 = vmatprep.subr.mxu0 0.0
  %807 = vmatpush1.msra.mxu0 0.0
  %808 = vmatprep.subr.mxu0 0.0
  %809 = vmatpush1.msra.mxu0 0.0
  %810 = vmatprep.subr.mxu0 0.0
  %811 = vmatpush1.msra.mxu0 0.0
  %812 = vmatprep.subr.mxu0 0.0
  %813 = vmatpush1.msra.mxu0 0.0
  %814 = vmatprep.subr.mxu0 0.0
  %815 = vmatpush1.msra.mxu0 0.0
  %816 = vmatprep.subr.mxu0 0.0
  %817 = vmatpush1.msra.mxu0 0.0
  %818 = vmatprep.mubr.f32.mxu0 0.0
  %819 = vmatmul.mubr.f32.gmra.mrb[0].mxu0 %v752
  %v820 = vpop.f32.mrb[0].mxu0
  %v821 = vadd.f32 0.0, %v820
  %v822 = vpop.f32.mrb[0].mxu0
  %823 = vdwg.mxu0
  %v824 = vadd.f32 %v748, %v821
  %v825 = vtanh.pop %v824
  %v826 = vxor.u32 %v824, 2147483648
  %v827 = vmul.f32 %v826, 1.442695
  %v828 = vpow.pop %v827
  %v829 = vadd.f32 %v828, 1.0
  %v830 = vrcp.pop %v829
  %v831 = vmul.f32 1.0, %v830
  %v832 = vsel %vm27, %v825, %v831
  %v833 = vmul.f32 %v832, %v740
  %835 = vrot.lane.b32.xlu0 %v832, 64
  %v836 = vpop.permute.xlu0 %835
  %v838 = vmul.f32 %v832, %v836
  %840 = vrot.lane.b32.xlu0 %v838, 32
  %v841 = vpop.permute.xlu0 %840
  %v843 = vadd.f32 %v833, %v841
  %v844 = vtanh.pop %v843
  %846 = vrot.lane.b32.xlu0 %v844, 64
  %v847 = vpop.permute.xlu0 %846
  %v849 = vmul.f32 %v832, %v847
  %v851 = vlaneseq
  %v852 = vshrl.u32 %v851, 7
  %v853 = vsub.s32 0, %v852
  %v854 = vrot.slane %v22, %v853
  %855 = vrot.lane.b32.xlu0 %v854, 96
  %v856 = vpop.permute.xlu0 %855
  %v858 = vmul.f32 %v849, %v856
  %860 = vrot.lane.b32.xlu0 %v858, 32
  %v861 = vpop.permute.xlu0 %860
  %vm863 = vcmask 254976
  %v864 = vsel %vm863, %v861, 0.0
  %865 = vadd.xlane.f32.xlu0 %v864
  %v866 = vpop.xlane.xlu0 %865
  %s867 = sld [smem:[#allocation2]]
  %v868 = vstv %s867
  %v869 = vadd.f32 %v866, %v868
  %vm870 = vcmask 1024
  %871 = vst.msk [vmem:[%s4] sm:$0x3] %vm870, %v869
  // Predicated region
  $region18: #{lstm_model_forward.1} parent=0 // pred_check
    _
  $region19: #{lstm_model_forward.1} parent=0 // pred_check_branch
    %873 = sbr.rel (0) target = $region21
  $region20: #{lstm_model_forward.1} parent=0 // pred_region
    _
  $region21: #{lstm_model_forward.1} parent=0 // pred_fallthru
    _
  // Predicated region
  $region22: #{lstm_model_forward.1} parent=0 // pred_check
    _
  $region23: #{lstm_model_forward.1} parent=0 // pred_check_branch
    %875 = sbr.rel (0) target = $region25
  $region24: #{lstm_model_forward.1} parent=0 // pred_region
    _
  $region25: #{lstm_model_forward.1} parent=0 // pred_fallthru
    _

</llo_original>
